<compile_context>
chip_gen: v7x
topology: tpu7x:2x2x1
jax: 0.10.0
libtpu: 0.0.40
codegen_flags: <defaults>
</compile_context>

<pallas_src>
import jax
import jax.numpy as jnp
from jax import lax
from jax.experimental import pallas as pl
from jax.experimental.pallas import tpu as pltpu

_LANES = 128
_SUBLANES = 8


def _round_up(x: int, m: int) -> int:
    return ((x + m - 1) // m) * m


def _sublane_pack(*dtypes) -> int:
    # Minimum sublane packing per dtype: f32 -> 8, bf16/f16 -> 16, int8/fp8 -> 32.
    pack = _SUBLANES
    for dt in dtypes:
        pack = max(pack, _SUBLANES * (4 // jnp.dtype(dt).itemsize))
    return pack


def _num_tensorcores() -> int:
    try:
        return max(1, int(getattr(jax.devices()[0], "num_cores", 1)))
    except Exception:
        return 1


def _make_focal_loss_kernel(gamma, alpha, total_n, row_tile, chunk, steps,
                            needs_mask, unroll):
    gamma = float(gamma)
    alpha = float(alpha)
    n_chunks = row_tile // chunk
    full_rows = total_n // _LANES          # rows that are completely valid
    lane_rem = total_n % _LANES            # valid lanes in row `full_rows`

    def chunk_loss(x_raw, y_raw):
        x = x_raw.astype(jnp.float32)
        y = y_raw.astype(jnp.float32)
        # BCEWithLogitsLoss(reduction='none'), numerically stable:
        #   max(x,0) - x*y + log1p(exp(-|x|))
        e = jnp.exp(-jnp.abs(x))                         # single EUP exp, reused
        bce = jnp.maximum(x, 0.0) - x * y + jnp.log1p(e)
        # sigmoid(x) from the same exp(-|x|); approx recip stays on the EUP slot
        r = pl.reciprocal(1.0 + e, approx=True)
        p = jnp.where(x >= 0.0, r, e * r)
        # Focal weighting, FMA-friendly algebra:
        #   alpha_factor = (1-alpha) + y*(2*alpha-1)
        #   t = 1 - p_t  = p + y*(1 - 2*p)
        alpha_factor = (1.0 - alpha) + y * (2.0 * alpha - 1.0)
        t = p + y * (1.0 - 2.0 * p)
        if gamma == 0.0:
            mod = 1.0
        elif gamma == 1.0:
            mod = t
        elif gamma == 1.5:
            mod = t * jnp.sqrt(t)                        # avoid pow -> exp(g*log(t))
        elif gamma == 2.0:
            mod = t * t
        else:
            mod = t ** gamma                             # 2 extra EUP ops
        return bce * alpha_factor * mod

    def fold(v):
        # (chunk, 128) -> (8, 128): pure VPU adds (no cross-lane XLU work);
        # the tiny final cross-lane reduce is done in the wrapper.
        return v.reshape(chunk // _SUBLANES, _SUBLANES, _LANES).sum(axis=0)

    def kernel(pred_ref, true_ref, out_ref):
        c = pl.program_id(0)          # parallel (multi-TensorCore) axis
        i = pl.program_id(1)          # arbitrary (reduction) axis

        @pl.when(i == 0)
        def _():
            out_ref[...] = jnp.zeros_like(out_ref)

        tile_row0 = (c * steps + i) * row_tile           # first row of this tile

        def accumulate(masked):
            def body(j, carry):
                r0 = pl.multiple_of(j * chunk, chunk)
                x = pred_ref[pl.ds(r0, chunk), :]
                y = true_ref[pl.ds(r0, chunk), :]
                loss = chunk_loss(x, y)
                if masked:
                    row = (tile_row0 + r0
                           + lax.broadcasted_iota(jnp.int32, (chunk, _LANES), 0))
                    valid = row < full_rows
                    if lane_rem:
                        lane = lax.broadcasted_iota(jnp.int32, (chunk, _LANES), 1)
                        valid = jnp.logical_or(
                            valid,
                            jnp.logical_and(row == full_rows, lane < lane_rem))
                    # Must stay a select (not multiply): overhang rows hold
                    # unspecified data that may be NaN/Inf.
                    loss = jnp.where(valid, loss, 0.0)
                out_ref[...] += fold(loss)[None]
                return carry
            lax.fori_loop(0, n_chunks, body, 0, unroll=unroll)

        if not needs_mask:
            accumulate(False)
        else:
            # Gate the mask work to boundary tiles only (scalar predicate).
            is_full = tile_row0 + row_tile <= full_rows

            @pl.when(is_full)
            def _():
                accumulate(False)

            @pl.when(jnp.logical_not(is_full))
            def _():
                accumulate(True)

    return kernel


def focal_loss(pred, true, gamma=1.5, alpha=0.25, reduction="mean",
               max_row_tile=2048, chunk_rows=256):
    """FocalLoss(BCEWithLogitsLoss) forward (reduction = 'mean' or 'sum')."""
    assert pred.shape == true.shape
    # TODO(synk): reduction == 'none' (full elementwise output) not implemented;
    # the wrapped BCEWithLogitsLoss default ('mean') is what YOLO uses.
    assert reduction in ("mean", "sum")

    total_n = int(pred.size)
    pack = _sublane_pack(pred.dtype, true.dtype)
    lane_rem = total_n % _LANES
    rows = pl.cdiv(total_n, _LANES)

    flat_p = pred.reshape(-1)
    flat_t = true.reshape(-1)
    if lane_rem:
        # Rare case: pad only the sub-128 lane remainder so the (rows, 128)
        # reshape is legal; the in-kernel mask zeroes the pad contribution.
        pad = rows * _LANES - total_n
        flat_p = jnp.pad(flat_p, (0, pad))
        flat_t = jnp.pad(flat_t, (0, pad))
    pred2d = flat_p.reshape(rows, _LANES)   # metadata-only reshape, no HBM copy
    true2d = flat_t.reshape(rows, _LANES)

    assert max_row_tile % chunk_rows == 0 and max_row_tile % pack == 0
    assert chunk_rows % pack == 0
    if rows >= max_row_tile:
        row_tile = max_row_tile
    else:
        row_tile = _round_up(rows, pack)
        if row_tile > chunk_rows:
            row_tile = _round_up(row_tile, chunk_rows)
    chunk = min(chunk_rows, row_tile)
    n_chunks = row_tile // chunk
    unroll = True if n_chunks <= 4 else 2

    n_tiles = pl.cdiv(rows, row_tile)
    cores = _num_tensorcores()
    # Only split across cores when the tile count divides evenly (avoids a
    # wasted padded tile); on 1-TC chips (v5e/v6e) this is always 1.
    num_par = cores if (cores > 1 and n_tiles % cores == 0) else 1
    steps = n_tiles // num_par

    covered_rows = num_par * steps * row_tile
    needs_mask = covered_rows * _LANES != total_n

    kernel = _make_focal_loss_kernel(gamma, alpha, total_n, row_tile, chunk,
                                     steps, needs_mask, unroll)

    in_bytes = total_n * (pred.dtype.itemsize + true.dtype.itemsize)
    cost = pl.CostEstimate(
        flops=22 * total_n,
        transcendentals=4 * total_n,
        bytes_accessed=in_bytes + num_par * _SUBLANES * _LANES * 4,
    )

    partials = pl.pallas_call(
        kernel,
        out_shape=jax.ShapeDtypeStruct((num_par, _SUBLANES, _LANES), jnp.float32),
        grid_spec=pl.GridSpec(
            grid=(num_par, steps),
            in_specs=[
                pl.BlockSpec((row_tile, _LANES), lambda c, i: (c * steps + i, 0)),
                pl.BlockSpec((row_tile, _LANES), lambda c, i: (c * steps + i, 0)),
            ],
            out_specs=pl.BlockSpec((1, _SUBLANES, _LANES), lambda c, i: (c, 0, 0)),
        ),
        compiler_params=pltpu.CompilerParams(
            dimension_semantics=("parallel", "arbitrary"),
        ),
        cost_estimate=cost,
    )(pred2d, true2d)

    total = jnp.sum(partials)                    # tiny final cross-lane reduce
    if reduction == "mean":
        return total / jnp.float32(total_n)
    return total


def _reference_focal_loss(pred, true, gamma=1.5, alpha=0.25):
    x = pred.astype(jnp.float32)
    y = true.astype(jnp.float32)
    bce = jnp.maximum(x, 0.0) - x * y + jnp.log1p(jnp.exp(-jnp.abs(x)))
    p = jax.nn.sigmoid(x)
    p_t = y * p + (1 - y) * (1 - p)
    alpha_factor = y * alpha + (1 - y) * (1 - alpha)
    modulating_factor = (1.0 - p_t) ** gamma
    return jnp.mean(bce * alpha_factor * modulating_factor)


if __name__ == "__main__":
    key = jax.random.PRNGKey(0)
    k1, k2 = jax.random.split(key)

    # pred: raw logits NCHW; true: binary targets (as in YOLO obj/cls losses)
    B, C, H, W = 2, 4, 16, 16
    pred = jax.random.normal(k1, (B, C, H, W), dtype=jnp.float32) * 2.0
    true = (jax.random.uniform(k2, (B, C, H, W)) > 0.7).astype(jnp.float32)

    out = focal_loss(pred, true, gamma=1.5, alpha=0.25)
    out = jax.block_until_ready(out)

    ref = _reference_focal_loss(pred, true, gamma=1.5, alpha=0.25)
    # Tolerance loosened for pl.reciprocal(approx=True) (~1e-4 rel on sigmoid).
    assert jnp.allclose(out, ref, rtol=5e-3, atol=1e-6), (out, ref)

    print("KERNEL_OK")
</pallas_src>

<mosaic_0001>
module attributes {stable_mosaic.version = 11 : i64} {
  func.func @kernel(%arg0: i32, %arg1: i32, %arg2: memref<16x128xf32, #tpu.memory_space<vmem>>, %arg3: memref<16x128xf32, #tpu.memory_space<vmem>>, %arg4: memref<1x8x128xf32, #tpu.memory_space<vmem>>) attributes {dimension_semantics = [#tpu.dimension_semantics<parallel>, #tpu.dimension_semantics<arbitrary>], iteration_bounds = array<i64: 1, 1>, scalar_prefetch = 0 : i64, scratch_operands = 0 : i64, tpu.core_type = #tpu.core_type<tc>, window_params = [{transform_indices = @transform_0, window_bounds = array<i64: 16, 128>}, {transform_indices = @transform_1, window_bounds = array<i64: 16, 128>}, {transform_indices = @transform_2, window_bounds = array<i64: 1, 8, 128>}]} {
    %c0_i32 = arith.constant 0 : i32
    %0 = arith.cmpi eq, %arg1, %c0_i32 : i32
    %1 = arith.extui %0 : i1 to i32
    %c0_i32_0 = arith.constant 0 : i32
    %2 = arith.cmpi ne, %1, %c0_i32_0 : i32
    scf.if %2 {
      %cst_17 = arith.constant 0.000000e+00 : f32
      %46 = vector.broadcast %cst_17 : f32 to vector<1x8x128xf32>
      %c0_18 = arith.constant 0 : index
      %c0_19 = arith.constant 0 : index
      %c0_20 = arith.constant 0 : index
      %47 = vector.load %arg4[%c0_18, %c0_19, %c0_20] : memref<1x8x128xf32, #tpu.memory_space<vmem>>, vector<1x8x128xf32>
      tpu.vector_store %arg4[%c0_18, %c0_19, %c0_20], %46 {strides = array<i32>} : memref<1x8x128xf32, #tpu.memory_space<vmem>>, vector<1x8x128xf32>,
    } else {
    }
    %c0_i32_1 = arith.constant 0 : i32
    %c16_i32 = arith.constant 16 : i32
    %3 = arith.muli %c0_i32_1, %c16_i32 : i32
    %4 = tpu.assume_multiple %3, 16 : i32
    %5 = arith.index_cast %4 : i32 to index
    %c0 = arith.constant 0 : index
    %6 = vector.load %arg2[%5, %c0] : memref<16x128xf32, #tpu.memory_space<vmem>>, vector<16x128xf32>
    %7 = arith.index_cast %4 : i32 to index
    %c0_2 = arith.constant 0 : index
    %8 = vector.load %arg3[%7, %c0_2] : memref<16x128xf32, #tpu.memory_space<vmem>>, vector<16x128xf32>
    %9 = math.absf %6 : vector<16x128xf32>
    %cst = arith.constant 0.000000e+00 : f32
    %10 = vector.broadcast %cst : f32 to vector<16x128xf32>
    %11 = arith.subf %10, %9 : vector<16x128xf32>
    %12 = math.exp %11 : vector<16x128xf32>
    %cst_3 = arith.constant 0.000000e+00 : f32
    %13 = vector.broadcast %cst_3 : f32 to vector<16x128xf32>
    %14 = arith.maximumf %6, %13 : vector<16x128xf32>
    %15 = arith.mulf %6, %8 : vector<16x128xf32>
    %16 = arith.subf %14, %15 : vector<16x128xf32>
    %17 = math.log1p %12 : vector<16x128xf32>
    %18 = arith.addf %16, %17 : vector<16x128xf32>
    %cst_4 = arith.constant 1.000000e+00 : f32
    %19 = vector.broadcast %cst_4 : f32 to vector<16x128xf32>
    %20 = arith.addf %19, %12 : vector<16x128xf32>
    %21 = tpu.reciprocal %20 {approx = true} : vector<16x128xf32> -> vector<16x128xf32>
    %cst_5 = arith.constant 0.000000e+00 : f32
    %22 = vector.broadcast %cst_5 : f32 to vector<16x128xf32>
    %23 = arith.cmpf oge, %6, %22 : vector<16x128xf32>
    %24 = arith.mulf %12, %21 : vector<16x128xf32>
    %25 = arith.select %23, %21, %24 : vector<16x128xi1>, vector<16x128xf32>
    %cst_6 = arith.constant -5.000000e-01 : f32
    %26 = vector.broadcast %cst_6 : f32 to vector<16x128xf32>
    %27 = arith.mulf %8, %26 : vector<16x128xf32>
    %cst_7 = arith.constant 7.500000e-01 : f32
    %28 = vector.broadcast %cst_7 : f32 to vector<16x128xf32>
    %29 = arith.addf %28, %27 : vector<16x128xf32>
    %cst_8 = arith.constant 2.000000e+00 : f32
    %30 = vector.broadcast %cst_8 : f32 to vector<16x128xf32>
    %31 = arith.mulf %30, %25 : vector<16x128xf32>
    %cst_9 = arith.constant 1.000000e+00 : f32
    %32 = vector.broadcast %cst_9 : f32 to vector<16x128xf32>
    %33 = arith.subf %32, %31 : vector<16x128xf32>
    %34 = arith.mulf %8, %33 : vector<16x128xf32>
    %35 = arith.addf %25, %34 : vector<16x128xf32>
    %36 = math.sqrt %35 : vector<16x128xf32>
    %37 = arith.mulf %35, %36 : vector<16x128xf32>
    %38 = arith.mulf %18, %29 : vector<16x128xf32>
    %39 = arith.mulf %38, %37 : vector<16x128xf32>
    %c0_10 = arith.constant 0 : index
    %c0_11 = arith.constant 0 : index
    %c0_12 = arith.constant 0 : index
    %40 = vector.load %arg4[%c0_10, %c0_11, %c0_12] : memref<1x8x128xf32, #tpu.memory_space<vmem>>, vector<1x8x128xf32>
    %41 = vector.shape_cast %39 : vector<16x128xf32> to vector<2x8x128xf32>
    %cst_13 = arith.constant dense<0.000000e+00> : vector<8x128xf32>
    %42 = vector.multi_reduction <add>, %41, %cst_13 [0] : vector<2x8x128xf32> to vector<8x128xf32>
    %43 = vector.shape_cast %42 : vector<8x128xf32> to vector<1x8x128xf32>
    %44 = arith.addf %40, %43 : vector<1x8x128xf32>
    %c0_14 = arith.constant 0 : index
    %c0_15 = arith.constant 0 : index
    %c0_16 = arith.constant 0 : index
    %45 = vector.load %arg4[%c0_14, %c0_15, %c0_16] : memref<1x8x128xf32, #tpu.memory_space<vmem>>, vector<1x8x128xf32>
    tpu.vector_store %arg4[%c0_14, %c0_15, %c0_16], %44 {strides = array<i32>} : memref<1x8x128xf32, #tpu.memory_space<vmem>>, vector<1x8x128xf32>,
    %c1_i32 = arith.constant 1 : i32
    return
  }
  func.func @transform_0(%arg0: i32, %arg1: i32) -> (i32, i32) {
    %c1_i32 = arith.constant 1 : i32
    %0 = arith.muli %arg0, %c1_i32 : i32
    %1 = arith.addi %0, %arg1 : i32
    %c0_i32 = arith.constant 0 : i32
    %c0_i32_0 = arith.constant 0 : i32
    return %1, %c0_i32 : i32, i32
  }
  func.func @transform_1(%arg0: i32, %arg1: i32) -> (i32, i32) {
    %c1_i32 = arith.constant 1 : i32
    %0 = arith.muli %arg0, %c1_i32 : i32
    %1 = arith.addi %0, %arg1 : i32
    %c0_i32 = arith.constant 0 : i32
    %c0_i32_0 = arith.constant 0 : i32
    return %1, %c0_i32 : i32, i32
  }
  func.func @transform_2(%arg0: i32, %arg1: i32) -> (i32, i32, i32) {
    %c0_i32 = arith.constant 0 : i32
    %c0_i32_0 = arith.constant 0 : i32
    %c0_i32_1 = arith.constant 0 : i32
    return %arg0, %c0_i32, %c0_i32_0 : i32, i32, i32
  }
}

</mosaic_0001>

<llo_original>
// kernel: tpu_custom_call.1
$region0: #{tpu_custom_call.1}
  #allocation0 [shape = 'u32[]', space=smem, size = 0x4, offset = 0x4, fixed_abs, tag = 'smem constant byte address 0x4 - core index']
  #allocation1 [shape = 'u32[144,128]{1,0:T(1,128)}', space=vmem, size = 0x12000, scoped, tag = 'internal scratch']
  %s0 = inlined_call_operand.hbm [shape: f32[16,128], index: 0, kind: input, shape index: {}]
  %s1 = inlined_call_operand.hbm [shape: f32[16,128], index: 1, kind: input, shape index: {}]
  %s2 = inlined_call_operand.hbm [shape: f32[1,8,128], index: 2, kind: output, shape index: {}]
  %s3 = sld [smem:[#allocation0]]
  $region30: #{tpu_custom_call.1} parent=0
    _
  %s5 = ssub.s32 1, %s3
  %s6 = scalar_select 0, %s5, %s3
  $region1: #{tpu_custom_call.1} parent=0
    #allocation2 [shape = 'u8[8192]{0}', space=vmem, size = 0x2000, scoped, tag = 'input window, operand 0, single buffered']
    #allocation3 [shape = 's32[1]{0}', space=sflag, size = 0x4, scoped, tag = 'scoped memory for tpu_custom_call.1']
    #allocation4 [shape = 's32[1]{0}', space=sflag, size = 0x4, scoped, tag = 'scoped memory for tpu_custom_call.1']
    #allocation5 [shape = 'u8[8192]{0}', space=vmem, size = 0x2000, scoped, tag = 'input window, operand 1, single buffered']
    #allocation6 [shape = 's32[1]{0}', space=sflag, size = 0x4, scoped, tag = 'scoped memory for tpu_custom_call.1']
    #allocation7 [shape = 'u8[4096]{0}', space=vmem, size = 0x1000, scoped, tag = 'output window, operand 0, single buffered']
    %7 = vsyncpa [#allocation3], 0
    %8 = vsyncpa [#allocation6], 0
    %9 = vsyncpa [#allocation4], 0
    // Predicated region
    $region2: #{tpu_custom_call.1} parent=1 // pred_check
      _
    $region3: #{tpu_custom_call.1} parent=1 // pred_check_branch
      %11 = sbr.rel (0) target = $region5
    $region4: #{tpu_custom_call.1} parent=1 // pred_region
      %s12 = sadd.s32 0, 0
      %s13 = smul.u32 2, %s12
      %s15 = ssub.s32 256, 256
      %16 = vsyncadd [#allocation3], %s15
      %s17 = smul.addr %s13, 128
      %s18 = scalar_lea.hbm %s0, %s17
      %s19 = sshll.u32 [#allocation2], 4
      %s20 = int_to_ptr.vmem [resolvable:$true] %s19
      %25 = dma.hbm_to_vmem [thread:$0]  %s18, 256, %s20, [#allocation3], 128, 128, 8
    $region5: #{tpu_custom_call.1} parent=1 // pred_fallthru
      _
    // Predicated region
    $region6: #{tpu_custom_call.1} parent=1 // pred_check
      _
    $region7: #{tpu_custom_call.1} parent=1 // pred_check_branch
      %27 = sbr.rel (0) target = $region9
    $region8: #{tpu_custom_call.1} parent=1 // pred_region
      %s28 = sadd.s32 0, 0
      %s29 = smul.u32 2, %s28
      %s31 = ssub.s32 256, 256
      %32 = vsyncadd [#allocation6], %s31
      %s33 = smul.addr %s29, 128
      %s34 = scalar_lea.hbm %s1, %s33
      %s35 = sshll.u32 [#allocation5], 4
      %s36 = int_to_ptr.vmem [resolvable:$true] %s35
      %41 = dma.hbm_to_vmem [thread:$0]  %s34, 256, %s36, [#allocation6], 128, 128, 8
    $region9: #{tpu_custom_call.1} parent=1 // pred_fallthru
      _
    // Predicated region
    $region10: #{tpu_custom_call.1} parent=1 // pred_check
      _
    $region11: #{tpu_custom_call.1} parent=1 // pred_check_branch
      %43 = sbr.rel (0) target = $region13
    $region12: #{tpu_custom_call.1} parent=1 // pred_region
      %44 = dma.done [#allocation3], 256
    $region13: #{tpu_custom_call.1} parent=1 // pred_fallthru
      _
    // Predicated region
    $region14: #{tpu_custom_call.1} parent=1 // pred_check
      _
    $region15: #{tpu_custom_call.1} parent=1 // pred_check_branch
      %46 = sbr.rel (0) target = $region17
    $region16: #{tpu_custom_call.1} parent=1 // pred_region
      %47 = dma.done [#allocation6], 256
    $region17: #{tpu_custom_call.1} parent=1 // pred_fallthru
      _
    %s48 = sadd.s32 0, 0
    %s49 = smul.u32 2, %s48
    %s50 = sadd.s32 0, 0
    %s51 = smul.u32 2, %s50
    %p52 = scmp.eq.s32.totalorder 0, 0
    // Predicated region
    $region18: #{tpu_custom_call.1} parent=1 // pred_check
      %p53 = pneg %p52
    $region19: #{tpu_custom_call.1} parent=1 // pred_check_branch
      %55 = sbr.rel (%p53) target = $region21
    $region20: #{tpu_custom_call.1} parent=1 // pred_region
      %56 = vst [vmem:[#allocation7] sm:$0xff] 0.0
    $region21: #{tpu_custom_call.1} parent=1 // pred_fallthru
      _
    %v57 = vld [vmem:[#allocation2] sm:$0xff]
    %v58 = vld [vmem:[#allocation2 + $0x8] sm:$0xff]
    %v59 = vld [vmem:[#allocation5] sm:$0xff]
    %v60 = vld [vmem:[#allocation5 + $0x8] sm:$0xff]
    %v61 = vand.u32 2147483647, %v57
    %v62 = vand.u32 2147483647, %v58
    %v63 = vsub.f32 0.0, %v61
    %v64 = vsub.f32 0.0, %v62
    %v65 = vmul.f32 %v63, 1.442695
    %v66 = vpow.pop %v65
    %v67 = vmul.f32 %v64, 1.442695
    %v68 = vpow.pop %v67
    %v69 = vmax.f32 %v57, 0.0
    %v70 = vmax.f32 %v58, 0.0
    %v71 = vmul.f32 %v57, %v59
    %v72 = vmul.f32 %v58, %v60
    %v73 = vsub.f32 %v69, %v71
    %v74 = vsub.f32 %v70, %v72
    %v75 = vadd.f32 %v66, 1.0
    %v76 = vlog2.pop %v75
    %v77 = vmul.f32 %v76, 0.6931472
    %v78 = vmul.f32 -0.5, %v66
    %v79 = vadd.f32 %v78, 1.0
    %v80 = vmul.f32 %v79, %v66
    %v81 = vand.u32 2147483647, %v66
    %vm82 = vcmp.lt.f32.partialorder %v81, 0.0004427343
    %v83 = vsel %vm82, %v80, %v77
    %v84 = vadd.f32 %v68, 1.0
    %v85 = vlog2.pop %v84
    %v86 = vmul.f32 %v85, 0.6931472
    %v87 = vmul.f32 -0.5, %v68
    %v88 = vadd.f32 %v87, 1.0
    %v89 = vmul.f32 %v88, %v68
    %v90 = vand.u32 2147483647, %v68
    %vm91 = vcmp.lt.f32.partialorder %v90, 0.0004427343
    %v92 = vsel %vm91, %v89, %v86
    %v93 = vadd.f32 %v73, %v83
    %v94 = vadd.f32 %v74, %v92
    %v95 = vadd.f32 %v66, 1.0
    %v96 = vadd.f32 %v68, 1.0
    %v97 = vrcp.pop %v95
    %v98 = vrcp.pop %v96
    %vm99 = vcmp.ge.f32.partialorder %v57, 0.0
    %vm100 = vcmp.ge.f32.partialorder %v58, 0.0
    %v101 = vmul.f32 %v66, %v97
    %v102 = vmul.f32 %v68, %v98
    %v103 = vsel %vm99, %v97, %v101
    %v104 = vsel %vm100, %v98, %v102
    %v105 = vmul.f32 %v59, -0.5
    %v106 = vmul.f32 %v60, -0.5
    %v107 = vadd.f32 %v105, 0.75
    %v108 = vadd.f32 %v106, 0.75
    %v109 = vmul.f32 %v103, 2.0
    %v110 = vmul.f32 %v104, 2.0
    %v111 = vsub.f32 1.0, %v109
    %v112 = vsub.f32 1.0, %v110
    %v113 = vmul.f32 %v59, %v111
    %v114 = vmul.f32 %v60, %v112
    %v115 = vadd.f32 %v103, %v113
    %v116 = vadd.f32 %v104, %v114
    %v117 = vrsqrt.pop %v115
    %v118 = vmul.f32 %v115, %v117
    %vm119 = vcmp.eq.f32.partialorder %v115, inf
    %v120 = vsel %vm119, %v115, %v118
    %vm121 = vcmp.eq.f32.partialorder %v115, 0.0
    %v122 = vand.u32 %v115, 2147483648
    %v123 = vsel %vm121, %v122, %v120
    %v124 = vrsqrt.pop %v116
    %v125 = vmul.f32 %v116, %v124
    %vm126 = vcmp.eq.f32.partialorder %v116, inf
    %v127 = vsel %vm126, %v116, %v125
    %vm128 = vcmp.eq.f32.partialorder %v116, 0.0
    %v129 = vand.u32 %v116, 2147483648
    %v130 = vsel %vm128, %v129, %v127
    %v131 = vmul.f32 %v115, %v123
    %v132 = vmul.f32 %v116, %v130
    %v133 = vmul.f32 %v93, %v107
    %v134 = vmul.f32 %v94, %v108
    %v135 = vmul.f32 %v133, %v131
    %v136 = vmul.f32 %v134, %v132
    %v137 = vld [vmem:[#allocation7] sm:$0xff]
    %v138 = vadd.f32 %v135, %v136
    %v139 = vadd.f32 %v137, %v138
    %140 = vst [vmem:[#allocation7] sm:$0xff] %v139
    // Predicated region
    $region22: #{tpu_custom_call.1} parent=1 // pred_check
      _
    $region23: #{tpu_custom_call.1} parent=1 // pred_check_branch
      %142 = sbr.rel (0) target = $region25
    $region24: #{tpu_custom_call.1} parent=1 // pred_region
      %s144 = ssub.s32 128, 128
      %145 = vsyncadd [#allocation4], %s144
      %s147 = sshll.u32 [#allocation7], 4
      %s148 = int_to_ptr.vmem [resolvable:$true] %s147
      %150 = dma.vmem_to_hbm [thread:$0]  %s148, 128, %s2, [#allocation4]
    $region25: #{tpu_custom_call.1} parent=1 // pred_fallthru
      _
    // Predicated region
    $region26: #{tpu_custom_call.1} parent=1 // pred_check
      _
    $region27: #{tpu_custom_call.1} parent=1 // pred_check_branch
      %152 = sbr.rel (0) target = $region29
    $region28: #{tpu_custom_call.1} parent=1 // pred_region
      %153 = dma.done [#allocation4], 128
    $region29: #{tpu_custom_call.1} parent=1 // pred_fallthru
      _
    %154 = vsyncpa [#allocation3], 1
    %155 = vsyncpa [#allocation6], 1
    %156 = vsyncpa [#allocation4], 1

</llo_original>
